<compile_context>
chip_gen: v5e
topology: v5e:2x2
jax: 0.10.0
libtpu: 0.0.40
codegen_flags: <defaults>
</compile_context>

<pallas_src>
import jax
import jax.numpy as jnp
from jax.experimental import pallas as pl
from jax.experimental.pallas import tpu as pltpu  # noqa: F401  (kept for parity / future scaling)

# ----------------------------- model dims (small, synthetic) ----------------
B, C, H, W = 2, 3, 16, 16          # input images (NCHW)
K = 3                              # conv kernel size (stride 1, pad 1)
HW = H * W                         # 256
N_ROWS = B * HW                    # 512  (all images' pixels stacked)
CKK = C * K * K                    # 27
NUM_FTRS = 64                      # stand-in for resnet50 fc.in_features (2048)
HIDDEN = 32                        # stand-in for hidden_layer=128
NUM_CLASSES = 10

LANE = 128                         # lane-dense padding target
P_PAD = LANE                       # padded patch width (CKK + ones col -> 128)
F_PAD = LANE                       # padded feature width
H_PAD = LANE                       # padded hidden width
NC_PAD = LANE                      # padded logits width

ONES_COL = CKK                     # index of the ones column in augmented patches
F_ONE = NUM_FTRS                   # lane that carries the constant 1 through features
H_ONE = HIDDEN                     # lane that carries the constant 1 through hidden


# ----------------------------- fused Pallas kernel ---------------------------
def fused_forward_kernel(p_ref, pool_ref, wc_ref, w1_ref, w2_ref, w3_ref, o_ref):
    """Whole batch in one shot: conv stem -> GAP (pool matmul) -> MLP head.

    All biases are pre-folded into the (augmented) weight matrices; the padded
    lane F_ONE / H_ONE carries an exact 1.0 through the network to apply them.
    """
    # conv stem: (B*HW, 128) @ (128, 128) on the MXU; bias is row ONES_COL of wc.
    conv = jnp.maximum(
        jnp.dot(p_ref[...], wc_ref[...], preferred_element_type=jnp.float32), 0.0)

    # global average pool: block-diagonal (B, B*HW) pooling matrix, 1/HW folded in.
    feats = jnp.dot(pool_ref[...], conv, preferred_element_type=jnp.float32)  # (B, F_PAD)

    # 3-layer MLP head; Dropout(p=0.3) is eval-mode identity; biases folded in.
    h = jnp.maximum(
        jnp.dot(feats, w1_ref[...], preferred_element_type=jnp.float32), 0.0)
    h = jnp.maximum(
        jnp.dot(h, w2_ref[...], preferred_element_type=jnp.float32), 0.0)
    o_ref[...] = jnp.dot(h, w3_ref[...], preferred_element_type=jnp.float32)  # (B, NC_PAD)


# ----------------------------- glue (plain JAX) ------------------------------
def im2col_3x3(x):
    """x: (B, C, H, W) -> patches (B, H*W, C*9), same-padded, stride 1."""
    b, c, h, w = x.shape
    xp = jnp.pad(x, ((0, 0), (0, 0), (1, 1), (1, 1)))
    cols = []
    for di in range(K):
        for dj in range(K):
            cols.append(xp[:, :, di:di + h, dj:dj + w])   # (B, C, H, W)
    p = jnp.stack(cols, axis=2)                           # (B, C, KK, H, W)
    p = p.transpose(0, 3, 4, 1, 2)                        # (B, H, W, C, KK)
    return p.reshape(b, h * w, c * K * K)


def prepare_params(params):
    """One-time (outside jit) padding + bias folding into augmented weights."""
    w_conv, b_conv, w1, b1, w2, b2, w3, b3 = params

    # conv weight: rows 0..CKK-1 = w_conv, row ONES_COL = bias + a 1.0 in lane
    # F_ONE so that lane F_ONE of the conv activation is exactly 1 everywhere.
    wc = jnp.zeros((P_PAD, F_PAD), jnp.float32)
    wc = wc.at[:CKK, :NUM_FTRS].set(w_conv)
    wc = wc.at[ONES_COL, :NUM_FTRS].set(b_conv.reshape(-1))
    wc = wc.at[ONES_COL, F_ONE].set(1.0)

    # head layer 1: bias in row F_ONE, and propagate the 1 into lane H_ONE.
    w1a = jnp.zeros((F_PAD, H_PAD), jnp.float32)
    w1a = w1a.at[:NUM_FTRS, :HIDDEN].set(w1)
    w1a = w1a.at[F_ONE, :HIDDEN].set(b1.reshape(-1))
    w1a = w1a.at[F_ONE, H_ONE].set(1.0)

    # head layer 2: bias in row H_ONE, keep propagating the 1 in lane H_ONE.
    w2a = jnp.zeros((H_PAD, H_PAD), jnp.float32)
    w2a = w2a.at[:HIDDEN, :HIDDEN].set(w2)
    w2a = w2a.at[H_ONE, :HIDDEN].set(b2.reshape(-1))
    w2a = w2a.at[H_ONE, H_ONE].set(1.0)

    # head layer 3 (logits): bias in row H_ONE.
    w3a = jnp.zeros((H_PAD, NC_PAD), jnp.float32)
    w3a = w3a.at[:HIDDEN, :NUM_CLASSES].set(w3)
    w3a = w3a.at[H_ONE, :NUM_CLASSES].set(b3.reshape(-1))

    # block-diagonal pooling matrix with the 1/HW mean folded in: (B, B*HW).
    pool = jnp.repeat(jnp.eye(B, dtype=jnp.float32), HW, axis=1) * (1.0 / HW)

    return (pool, wc, w1a, w2a, w3a)


@jax.jit
def my_model_forward(x, prepped):
    pool, wc, w1a, w2a, w3a = prepped

    # im2col + flatten the batch into one (B*HW, CKK) LHS, augment with the
    # ones column (for the folded conv bias) and pad lanes to 128.
    patches = im2col_3x3(x).reshape(N_ROWS, CKK)
    p_aug = jnp.zeros((N_ROWS, P_PAD), jnp.float32)
    p_aug = p_aug.at[:, :CKK].set(patches)
    p_aug = p_aug.at[:, ONES_COL].set(1.0)

    # Single program; every operand fits comfortably in VMEM, so no grid and
    # full-array blocks (whole-batch matmuls keep the MXU rows occupied).
    logits_padded = pl.pallas_call(
        fused_forward_kernel,
        out_shape=jax.ShapeDtypeStruct((B, NC_PAD), jnp.float32),
    )(p_aug, pool, wc, w1a, w2a, w3a)

    # strip the lane padding back to the real class count.
    return logits_padded[:, :NUM_CLASSES]


def reference_forward(x, params):
    """Pure-JAX reference for correctness checking (unpadded params)."""
    w_conv, b_conv, w1, b1, w2, b2, w3, b3 = params
    patches = im2col_3x3(x)                               # (B, HW, CKK)
    conv = jnp.maximum(patches @ w_conv + b_conv, 0.0)    # (B, HW, NUM_FTRS)
    feats = conv.mean(axis=1)                             # (B, NUM_FTRS)
    h = jnp.maximum(feats @ w1 + b1, 0.0)
    h = jnp.maximum(h @ w2 + b2, 0.0)
    return h @ w3 + b3


def init_params(key):
    """Deterministic init mirroring initialize_weights(): N(0, 0.01), bias 0."""
    ks = jax.random.split(key, 4)
    w_conv = 0.01 * jax.random.normal(ks[0], (CKK, NUM_FTRS), jnp.float32)
    b_conv = jnp.zeros((1, NUM_FTRS), jnp.float32)
    w1 = 0.01 * jax.random.normal(ks[1], (NUM_FTRS, HIDDEN), jnp.float32)
    b1 = jnp.zeros((1, HIDDEN), jnp.float32)
    w2 = 0.01 * jax.random.normal(ks[2], (HIDDEN, HIDDEN), jnp.float32)
    b2 = jnp.zeros((1, HIDDEN), jnp.float32)
    w3 = 0.01 * jax.random.normal(ks[3], (HIDDEN, NUM_CLASSES), jnp.float32)
    b3 = jnp.zeros((1, NUM_CLASSES), jnp.float32)
    return (w_conv, b_conv, w1, b1, w2, b2, w3, b3)


if __name__ == "__main__":
    key = jax.random.PRNGKey(0)
    kx, kp = jax.random.split(key)
    x = jax.random.normal(kx, (B, C, H, W), jnp.float32)   # NCHW input
    params = init_params(kp)
    prepped = prepare_params(params)                       # pad/fold ONCE, outside jit

    out = my_model_forward(x, prepped)
    out = jax.block_until_ready(out)
    assert out.shape == (B, NUM_CLASSES), out.shape

    ref = reference_forward(x, params)
    assert jnp.allclose(out, ref, atol=1e-5, rtol=1e-5), "mismatch vs reference"

    print("KERNEL_OK")
</pallas_src>

<mosaic_0001>
module attributes {stable_mosaic.version = 11 : i64} {
  func.func @fused_forward_kernel(%arg0: memref<512x128xf32, #tpu.memory_space<vmem>>, %arg1: memref<2x512xf32, #tpu.memory_space<vmem>>, %arg2: memref<128x128xf32, #tpu.memory_space<vmem>>, %arg3: memref<128x128xf32, #tpu.memory_space<vmem>>, %arg4: memref<128x128xf32, #tpu.memory_space<vmem>>, %arg5: memref<128x128xf32, #tpu.memory_space<vmem>>, %arg6: memref<2x128xf32, #tpu.memory_space<vmem>>) attributes {dimension_semantics = [], scalar_prefetch = 0 : i64, scratch_operands = 0 : i64, tpu.core_type = #tpu.core_type<tc>} {
    %c0 = arith.constant 0 : index
    %c0_0 = arith.constant 0 : index
    %0 = vector.load %arg0[%c0, %c0_0] : memref<512x128xf32, #tpu.memory_space<vmem>>, vector<512x128xf32>
    %c0_1 = arith.constant 0 : index
    %c0_2 = arith.constant 0 : index
    %1 = vector.load %arg2[%c0_1, %c0_2] : memref<128x128xf32, #tpu.memory_space<vmem>>, vector<128x128xf32>
    %cst = arith.constant dense<0.000000e+00> : vector<512x128xf32>
    %2 = tpu.matmul %0, %1, %cst {dimension_numbers = #tpu.dot_dimension_numbers<[1], [0], [0], [1], [0, 0, 1, 1], [], []>} : vector<512x128xf32>, vector<128x128xf32>, vector<512x128xf32> -> vector<512x128xf32>
    %cst_3 = arith.constant 0.000000e+00 : f32
    %3 = vector.broadcast %cst_3 : f32 to vector<512x128xf32>
    %4 = arith.maximumf %2, %3 : vector<512x128xf32>
    %c0_4 = arith.constant 0 : index
    %c0_5 = arith.constant 0 : index
    %5 = vector.load %arg1[%c0_4, %c0_5] : memref<2x512xf32, #tpu.memory_space<vmem>>, vector<2x512xf32>
    %cst_6 = arith.constant dense<0.000000e+00> : vector<2x128xf32>
    %6 = tpu.matmul %5, %4, %cst_6 {dimension_numbers = #tpu.dot_dimension_numbers<[1], [0], [0], [1], [0, 0, 1, 1], [], []>} : vector<2x512xf32>, vector<512x128xf32>, vector<2x128xf32> -> vector<2x128xf32>
    %c0_7 = arith.constant 0 : index
    %c0_8 = arith.constant 0 : index
    %7 = vector.load %arg3[%c0_7, %c0_8] : memref<128x128xf32, #tpu.memory_space<vmem>>, vector<128x128xf32>
    %cst_9 = arith.constant dense<0.000000e+00> : vector<2x128xf32>
    %8 = tpu.matmul %6, %7, %cst_9 {dimension_numbers = #tpu.dot_dimension_numbers<[1], [0], [0], [1], [0, 0, 1, 1], [], []>} : vector<2x128xf32>, vector<128x128xf32>, vector<2x128xf32> -> vector<2x128xf32>
    %cst_10 = arith.constant 0.000000e+00 : f32
    %9 = vector.broadcast %cst_10 : f32 to vector<2x128xf32>
    %10 = arith.maximumf %8, %9 : vector<2x128xf32>
    %c0_11 = arith.constant 0 : index
    %c0_12 = arith.constant 0 : index
    %11 = vector.load %arg4[%c0_11, %c0_12] : memref<128x128xf32, #tpu.memory_space<vmem>>, vector<128x128xf32>
    %cst_13 = arith.constant dense<0.000000e+00> : vector<2x128xf32>
    %12 = tpu.matmul %10, %11, %cst_13 {dimension_numbers = #tpu.dot_dimension_numbers<[1], [0], [0], [1], [0, 0, 1, 1], [], []>} : vector<2x128xf32>, vector<128x128xf32>, vector<2x128xf32> -> vector<2x128xf32>
    %cst_14 = arith.constant 0.000000e+00 : f32
    %13 = vector.broadcast %cst_14 : f32 to vector<2x128xf32>
    %14 = arith.maximumf %12, %13 : vector<2x128xf32>
    %c0_15 = arith.constant 0 : index
    %c0_16 = arith.constant 0 : index
    %15 = vector.load %arg5[%c0_15, %c0_16] : memref<128x128xf32, #tpu.memory_space<vmem>>, vector<128x128xf32>
    %cst_17 = arith.constant dense<0.000000e+00> : vector<2x128xf32>
    %16 = tpu.matmul %14, %15, %cst_17 {dimension_numbers = #tpu.dot_dimension_numbers<[1], [0], [0], [1], [0, 0, 1, 1], [], []>} : vector<2x128xf32>, vector<128x128xf32>, vector<2x128xf32> -> vector<2x128xf32>
    %c0_18 = arith.constant 0 : index
    %c0_19 = arith.constant 0 : index
    %17 = vector.load %arg6[%c0_18, %c0_19] : memref<2x128xf32, #tpu.memory_space<vmem>>, vector<2x128xf32>
    tpu.vector_store %arg6[%c0_18, %c0_19], %16 {strides = array<i32>} : memref<2x128xf32, #tpu.memory_space<vmem>>, vector<2x128xf32>,
    return
  }
}

</mosaic_0001>

<llo_original>
// kernel: my_model_forward.1
$region0: #{my_model_forward.1}
  #allocation0 [shape = 'u32[]', space=smem, size = 0x4, offset = 0x4, fixed_abs, tag = 'smem constant byte address 0x4 - core index']
  #allocation1 [shape = 'u32[72,128]{1,0:T(1,128)}', space=vmem, size = 0x9000, scoped, tag = 'internal scratch']
  %s0 = inlined_call_operand.vmem [shape: f32[512,128], index: 0, kind: input, shape index: {}]
  %s1 = inlined_call_operand.vmem [shape: f32[2,512], index: 1, kind: input, shape index: {}]
  %s2 = inlined_call_operand.vmem [shape: f32[128,128], index: 2, kind: input, shape index: {}]
  %s3 = inlined_call_operand.vmem [shape: f32[128,128], index: 3, kind: input, shape index: {}]
  %s4 = inlined_call_operand.vmem [shape: f32[128,128], index: 4, kind: input, shape index: {}]
  %s5 = inlined_call_operand.vmem [shape: f32[128,128], index: 5, kind: input, shape index: {}]
  %s6 = inlined_call_operand.hbm [shape: f32[2,128], index: 6, kind: output, shape index: {}]
  %s7 = sld [smem:[#allocation0]]
  $region34: #{my_model_forward.1} parent=0
    _
  %s9 = ssub.s32 1, %s7
  %s10 = scalar_select 0, %s9, %s7
  $region1: #{my_model_forward.1} parent=0
    #allocation2 [shape = 'u8[1024]{0}', space=vmem, size = 0x400, scoped, tag = 'output window, operand 0, single buffered']
    #allocation3 [shape = 's32[1]{0}', space=sflag, size = 0x4, scoped, tag = 'scoped memory for my_model_forward.1']
    %11 = vsyncpa [#allocation3], 0
    // Predicated region
    $region2: #{my_model_forward.1} parent=1 // pred_check
      _
    $region3: #{my_model_forward.1} parent=1 // pred_check_branch
      %13 = sbr.rel (0) target = $region5
    $region4: #{my_model_forward.1} parent=1 // pred_region
      _
    $region5: #{my_model_forward.1} parent=1 // pred_fallthru
      _
    // Predicated region
    $region6: #{my_model_forward.1} parent=1 // pred_check
      _
    $region7: #{my_model_forward.1} parent=1 // pred_check_branch
      %15 = sbr.rel (0) target = $region9
    $region8: #{my_model_forward.1} parent=1 // pred_region
      _
    $region9: #{my_model_forward.1} parent=1 // pred_fallthru
      _
    // Predicated region
    $region10: #{my_model_forward.1} parent=1 // pred_check
      _
    $region11: #{my_model_forward.1} parent=1 // pred_check_branch
      %17 = sbr.rel (0) target = $region13
    $region12: #{my_model_forward.1} parent=1 // pred_region
      _
    $region13: #{my_model_forward.1} parent=1 // pred_fallthru
      _
    // Predicated region
    $region14: #{my_model_forward.1} parent=1 // pred_check
      _
    $region15: #{my_model_forward.1} parent=1 // pred_check_branch
      %19 = sbr.rel (0) target = $region17
    $region16: #{my_model_forward.1} parent=1 // pred_region
      _
    $region17: #{my_model_forward.1} parent=1 // pred_fallthru
      _
    // Predicated region
    $region18: #{my_model_forward.1} parent=1 // pred_check
      _
    $region19: #{my_model_forward.1} parent=1 // pred_check_branch
      %21 = sbr.rel (0) target = $region21
    $region20: #{my_model_forward.1} parent=1 // pred_region
      _
    $region21: #{my_model_forward.1} parent=1 // pred_fallthru
      _
    // Predicated region
    $region22: #{my_model_forward.1} parent=1 // pred_check
      _
    $region23: #{my_model_forward.1} parent=1 // pred_check_branch
      %23 = sbr.rel (0) target = $region25
    $region24: #{my_model_forward.1} parent=1 // pred_region
      _
    $region25: #{my_model_forward.1} parent=1 // pred_fallthru
      _
    %v24 = vld [vmem:[%s0] sm:$0xff]
    %v25 = vld [vmem:[%s0 + $0x8] sm:$0xff]
    %v26 = vld [vmem:[%s0 + $0x10] sm:$0xff]
    %v27 = vld [vmem:[%s0 + $0x18] sm:$0xff]
    %v28 = vld [vmem:[%s0 + $0x20] sm:$0xff]
    %v29 = vld [vmem:[%s0 + $0x28] sm:$0xff]
    %v30 = vld [vmem:[%s0 + $0x30] sm:$0xff]
    %v31 = vld [vmem:[%s0 + $0x38] sm:$0xff]
    %v32 = vld [vmem:[%s0 + $0x40] sm:$0xff]
    %v33 = vld [vmem:[%s0 + $0x48] sm:$0xff]
    %v34 = vld [vmem:[%s0 + $0x50] sm:$0xff]
    %v35 = vld [vmem:[%s0 + $0x58] sm:$0xff]
    %v36 = vld [vmem:[%s0 + $0x60] sm:$0xff]
    %v37 = vld [vmem:[%s0 + $0x68] sm:$0xff]
    %v38 = vld [vmem:[%s0 + $0x70] sm:$0xff]
    %v39 = vld [vmem:[%s0 + $0x78] sm:$0xff]
    %v40 = vld [vmem:[%s0 + $0x80] sm:$0xff]
    %v41 = vld [vmem:[%s0 + $0x88] sm:$0xff]
    %v42 = vld [vmem:[%s0 + $0x90] sm:$0xff]
    %v43 = vld [vmem:[%s0 + $0x98] sm:$0xff]
    %v44 = vld [vmem:[%s0 + $0xa0] sm:$0xff]
    %v45 = vld [vmem:[%s0 + $0xa8] sm:$0xff]
    %v46 = vld [vmem:[%s0 + $0xb0] sm:$0xff]
    %v47 = vld [vmem:[%s0 + $0xb8] sm:$0xff]
    %v48 = vld [vmem:[%s0 + $0xc0] sm:$0xff]
    %v49 = vld [vmem:[%s0 + $0xc8] sm:$0xff]
    %v50 = vld [vmem:[%s0 + $0xd0] sm:$0xff]
    %v51 = vld [vmem:[%s0 + $0xd8] sm:$0xff]
    %v52 = vld [vmem:[%s0 + $0xe0] sm:$0xff]
    %v53 = vld [vmem:[%s0 + $0xe8] sm:$0xff]
    %v54 = vld [vmem:[%s0 + $0xf0] sm:$0xff]
    %v55 = vld [vmem:[%s0 + $0xf8] sm:$0xff]
    %v56 = vld [vmem:[%s0 + $0x100] sm:$0xff]
    %v57 = vld [vmem:[%s0 + $0x108] sm:$0xff]
    %v58 = vld [vmem:[%s0 + $0x110] sm:$0xff]
    %v59 = vld [vmem:[%s0 + $0x118] sm:$0xff]
    %v60 = vld [vmem:[%s0 + $0x120] sm:$0xff]
    %v61 = vld [vmem:[%s0 + $0x128] sm:$0xff]
    %v62 = vld [vmem:[%s0 + $0x130] sm:$0xff]
    %v63 = vld [vmem:[%s0 + $0x138] sm:$0xff]
    %v64 = vld [vmem:[%s0 + $0x140] sm:$0xff]
    %v65 = vld [vmem:[%s0 + $0x148] sm:$0xff]
    %v66 = vld [vmem:[%s0 + $0x150] sm:$0xff]
    %v67 = vld [vmem:[%s0 + $0x158] sm:$0xff]
    %v68 = vld [vmem:[%s0 + $0x160] sm:$0xff]
    %v69 = vld [vmem:[%s0 + $0x168] sm:$0xff]
    %v70 = vld [vmem:[%s0 + $0x170] sm:$0xff]
    %v71 = vld [vmem:[%s0 + $0x178] sm:$0xff]
    %v72 = vld [vmem:[%s0 + $0x180] sm:$0xff]
    %v73 = vld [vmem:[%s0 + $0x188] sm:$0xff]
    %v74 = vld [vmem:[%s0 + $0x190] sm:$0xff]
    %v75 = vld [vmem:[%s0 + $0x198] sm:$0xff]
    %v76 = vld [vmem:[%s0 + $0x1a0] sm:$0xff]
    %v77 = vld [vmem:[%s0 + $0x1a8] sm:$0xff]
    %v78 = vld [vmem:[%s0 + $0x1b0] sm:$0xff]
    %v79 = vld [vmem:[%s0 + $0x1b8] sm:$0xff]
    %v80 = vld [vmem:[%s0 + $0x1c0] sm:$0xff]
    %v81 = vld [vmem:[%s0 + $0x1c8] sm:$0xff]
    %v82 = vld [vmem:[%s0 + $0x1d0] sm:$0xff]
    %v83 = vld [vmem:[%s0 + $0x1d8] sm:$0xff]
    %v84 = vld [vmem:[%s0 + $0x1e0] sm:$0xff]
    %v85 = vld [vmem:[%s0 + $0x1e8] sm:$0xff]
    %v86 = vld [vmem:[%s0 + $0x1f0] sm:$0xff]
    %v87 = vld [vmem:[%s0 + $0x1f8] sm:$0xff]
    %v88 = vld [vmem:[%s2] sm:$0xff]
    %v89 = vld [vmem:[%s2 + $0x8] sm:$0xff]
    %v90 = vld [vmem:[%s2 + $0x10] sm:$0xff]
    %v91 = vld [vmem:[%s2 + $0x18] sm:$0xff]
    %v92 = vld [vmem:[%s2 + $0x20] sm:$0xff]
    %v93 = vld [vmem:[%s2 + $0x28] sm:$0xff]
    %v94 = vld [vmem:[%s2 + $0x30] sm:$0xff]
    %v95 = vld [vmem:[%s2 + $0x38] sm:$0xff]
    %v96 = vld [vmem:[%s2 + $0x40] sm:$0xff]
    %v97 = vld [vmem:[%s2 + $0x48] sm:$0xff]
    %v98 = vld [vmem:[%s2 + $0x50] sm:$0xff]
    %v99 = vld [vmem:[%s2 + $0x58] sm:$0xff]
    %v100 = vld [vmem:[%s2 + $0x60] sm:$0xff]
    %v101 = vld [vmem:[%s2 + $0x68] sm:$0xff]
    %v102 = vld [vmem:[%s2 + $0x70] sm:$0xff]
    %v103 = vld [vmem:[%s2 + $0x78] sm:$0xff]
    %104 = vmatpush.msra.mxu0 %v103
    %105 = vmatpush.msra.mxu0 %v102
    %106 = vmatpush.msra.mxu0 %v101
    %107 = vmatpush.msra.mxu0 %v100
    %108 = vmatpush.msra.mxu0 %v99
    %109 = vmatpush.msra.mxu0 %v98
    %110 = vmatpush.msra.mxu0 %v97
    %111 = vmatpush.msra.mxu0 %v96
    %112 = vmatpush.msra.mxu0 %v95
    %113 = vmatpush.msra.mxu0 %v94
    %114 = vmatpush.msra.mxu0 %v93
    %115 = vmatpush.msra.mxu0 %v92
    %116 = vmatpush.msra.mxu0 %v91
    %117 = vmatpush.msra.mxu0 %v90
    %118 = vmatpush.msra.mxu0 %v89
    %119 = vmatpush.msra.mxu0 %v88
    %120 = vmatmul.f32.gmra.mxu0 %v24
    %v121 = vpop.f32.mrf.mxu0
    %v122 = vadd.f32 0.0, %v121
    %123 = vmatmul.f32.gmra.mxu0 %v25
    %v124 = vpop.f32.mrf.mxu0
    %v125 = vadd.f32 0.0, %v124
    %126 = vmatmul.f32.gmra.mxu0 %v26
    %v127 = vpop.f32.mrf.mxu0
    %v128 = vadd.f32 0.0, %v127
    %129 = vmatmul.f32.gmra.mxu0 %v27
    %v130 = vpop.f32.mrf.mxu0
    %v131 = vadd.f32 0.0, %v130
    %132 = vmatmul.f32.gmra.mxu0 %v28
    %v133 = vpop.f32.mrf.mxu0
    %v134 = vadd.f32 0.0, %v133
    %135 = vmatmul.f32.gmra.mxu0 %v29
    %v136 = vpop.f32.mrf.mxu0
    %v137 = vadd.f32 0.0, %v136
    %138 = vmatmul.f32.gmra.mxu0 %v30
    %v139 = vpop.f32.mrf.mxu0
    %v140 = vadd.f32 0.0, %v139
    %141 = vmatmul.f32.gmra.mxu0 %v31
    %v142 = vpop.f32.mrf.mxu0
    %v143 = vadd.f32 0.0, %v142
    %144 = vmatmul.f32.gmra.mxu0 %v32
    %v145 = vpop.f32.mrf.mxu0
    %v146 = vadd.f32 0.0, %v145
    %147 = vmatmul.f32.gmra.mxu0 %v33
    %v148 = vpop.f32.mrf.mxu0
    %v149 = vadd.f32 0.0, %v148
    %150 = vmatmul.f32.gmra.mxu0 %v34
    %v151 = vpop.f32.mrf.mxu0
    %v152 = vadd.f32 0.0, %v151
    %153 = vmatmul.f32.gmra.mxu0 %v35
    %v154 = vpop.f32.mrf.mxu0
    %v155 = vadd.f32 0.0, %v154
    %156 = vmatmul.f32.gmra.mxu0 %v36
    %v157 = vpop.f32.mrf.mxu0
    %v158 = vadd.f32 0.0, %v157
    %159 = vmatmul.f32.gmra.mxu0 %v37
    %v160 = vpop.f32.mrf.mxu0
    %v161 = vadd.f32 0.0, %v160
    %162 = vmatmul.f32.gmra.mxu0 %v38
    %v163 = vpop.f32.mrf.mxu0
    %v164 = vadd.f32 0.0, %v163
    %165 = vmatmul.f32.gmra.mxu0 %v39
    %v166 = vpop.f32.mrf.mxu0
    %v167 = vadd.f32 0.0, %v166
    %168 = vmatmul.f32.gmra.mxu0 %v40
    %v169 = vpop.f32.mrf.mxu0
    %v170 = vadd.f32 0.0, %v169
    %171 = vmatmul.f32.gmra.mxu0 %v41
    %v172 = vpop.f32.mrf.mxu0
    %v173 = vadd.f32 0.0, %v172
    %174 = vmatmul.f32.gmra.mxu0 %v42
    %v175 = vpop.f32.mrf.mxu0
    %v176 = vadd.f32 0.0, %v175
    %177 = vmatmul.f32.gmra.mxu0 %v43
    %v178 = vpop.f32.mrf.mxu0
    %v179 = vadd.f32 0.0, %v178
    %180 = vmatmul.f32.gmra.mxu0 %v44
    %v181 = vpop.f32.mrf.mxu0
    %v182 = vadd.f32 0.0, %v181
    %183 = vmatmul.f32.gmra.mxu0 %v45
    %v184 = vpop.f32.mrf.mxu0
    %v185 = vadd.f32 0.0, %v184
    %186 = vmatmul.f32.gmra.mxu0 %v46
    %v187 = vpop.f32.mrf.mxu0
    %v188 = vadd.f32 0.0, %v187
    %189 = vmatmul.f32.gmra.mxu0 %v47
    %v190 = vpop.f32.mrf.mxu0
    %v191 = vadd.f32 0.0, %v190
    %192 = vmatmul.f32.gmra.mxu0 %v48
    %v193 = vpop.f32.mrf.mxu0
    %v194 = vadd.f32 0.0, %v193
    %195 = vmatmul.f32.gmra.mxu0 %v49
    %v196 = vpop.f32.mrf.mxu0
    %v197 = vadd.f32 0.0, %v196
    %198 = vmatmul.f32.gmra.mxu0 %v50
    %v199 = vpop.f32.mrf.mxu0
    %v200 = vadd.f32 0.0, %v199
    %201 = vmatmul.f32.gmra.mxu0 %v51
    %v202 = vpop.f32.mrf.mxu0
    %v203 = vadd.f32 0.0, %v202
    %204 = vmatmul.f32.gmra.mxu0 %v52
    %v205 = vpop.f32.mrf.mxu0
    %v206 = vadd.f32 0.0, %v205
    %207 = vmatmul.f32.gmra.mxu0 %v53
    %v208 = vpop.f32.mrf.mxu0
    %v209 = vadd.f32 0.0, %v208
    %210 = vmatmul.f32.gmra.mxu0 %v54
    %v211 = vpop.f32.mrf.mxu0
    %v212 = vadd.f32 0.0, %v211
    %213 = vmatmul.f32.gmra.mxu0 %v55
    %v214 = vpop.f32.mrf.mxu0
    %v215 = vadd.f32 0.0, %v214
    %216 = vmatmul.f32.gmra.mxu0 %v56
    %v217 = vpop.f32.mrf.mxu0
    %v218 = vadd.f32 0.0, %v217
    %219 = vmatmul.f32.gmra.mxu0 %v57
    %v220 = vpop.f32.mrf.mxu0
    %v221 = vadd.f32 0.0, %v220
    %222 = vmatmul.f32.gmra.mxu0 %v58
    %v223 = vpop.f32.mrf.mxu0
    %v224 = vadd.f32 0.0, %v223
    %225 = vmatmul.f32.gmra.mxu0 %v59
    %v226 = vpop.f32.mrf.mxu0
    %v227 = vadd.f32 0.0, %v226
    %228 = vmatmul.f32.gmra.mxu0 %v60
    %v229 = vpop.f32.mrf.mxu0
    %v230 = vadd.f32 0.0, %v229
    %231 = vmatmul.f32.gmra.mxu0 %v61
    %v232 = vpop.f32.mrf.mxu0
    %v233 = vadd.f32 0.0, %v232
    %234 = vmatmul.f32.gmra.mxu0 %v62
    %v235 = vpop.f32.mrf.mxu0
    %v236 = vadd.f32 0.0, %v235
    %237 = vmatmul.f32.gmra.mxu0 %v63
    %v238 = vpop.f32.mrf.mxu0
    %v239 = vadd.f32 0.0, %v238
    %240 = vmatmul.f32.gmra.mxu0 %v64
    %v241 = vpop.f32.mrf.mxu0
    %v242 = vadd.f32 0.0, %v241
    %243 = vmatmul.f32.gmra.mxu0 %v65
    %v244 = vpop.f32.mrf.mxu0
    %v245 = vadd.f32 0.0, %v244
    %246 = vmatmul.f32.gmra.mxu0 %v66
    %v247 = vpop.f32.mrf.mxu0
    %v248 = vadd.f32 0.0, %v247
    %249 = vmatmul.f32.gmra.mxu0 %v67
    %v250 = vpop.f32.mrf.mxu0
    %v251 = vadd.f32 0.0, %v250
    %252 = vmatmul.f32.gmra.mxu0 %v68
    %v253 = vpop.f32.mrf.mxu0
    %v254 = vadd.f32 0.0, %v253
    %255 = vmatmul.f32.gmra.mxu0 %v69
    %v256 = vpop.f32.mrf.mxu0
    %v257 = vadd.f32 0.0, %v256
    %258 = vmatmul.f32.gmra.mxu0 %v70
    %v259 = vpop.f32.mrf.mxu0
    %v260 = vadd.f32 0.0, %v259
    %261 = vmatmul.f32.gmra.mxu0 %v71
    %v262 = vpop.f32.mrf.mxu0
    %v263 = vadd.f32 0.0, %v262
    %264 = vmatmul.f32.gmra.mxu0 %v72
    %v265 = vpop.f32.mrf.mxu0
    %v266 = vadd.f32 0.0, %v265
    %267 = vmatmul.f32.gmra.mxu0 %v73
    %v268 = vpop.f32.mrf.mxu0
    %v269 = vadd.f32 0.0, %v268
    %270 = vmatmul.f32.gmra.mxu0 %v74
    %v271 = vpop.f32.mrf.mxu0
    %v272 = vadd.f32 0.0, %v271
    %273 = vmatmul.f32.gmra.mxu0 %v75
    %v274 = vpop.f32.mrf.mxu0
    %v275 = vadd.f32 0.0, %v274
    %276 = vmatmul.f32.gmra.mxu0 %v76
    %v277 = vpop.f32.mrf.mxu0
    %v278 = vadd.f32 0.0, %v277
    %279 = vmatmul.f32.gmra.mxu0 %v77
    %v280 = vpop.f32.mrf.mxu0
    %v281 = vadd.f32 0.0, %v280
    %282 = vmatmul.f32.gmra.mxu0 %v78
    %v283 = vpop.f32.mrf.mxu0
    %v284 = vadd.f32 0.0, %v283
    %285 = vmatmul.f32.gmra.mxu0 %v79
    %v286 = vpop.f32.mrf.mxu0
    %v287 = vadd.f32 0.0, %v286
    %288 = vmatmul.f32.gmra.mxu0 %v80
    %v289 = vpop.f32.mrf.mxu0
    %v290 = vadd.f32 0.0, %v289
    %291 = vmatmul.f32.gmra.mxu0 %v81
    %v292 = vpop.f32.mrf.mxu0
    %v293 = vadd.f32 0.0, %v292
    %294 = vmatmul.f32.gmra.mxu0 %v82
    %v295 = vpop.f32.mrf.mxu0
    %v296 = vadd.f32 0.0, %v295
    %297 = vmatmul.f32.gmra.mxu0 %v83
    %v298 = vpop.f32.mrf.mxu0
    %v299 = vadd.f32 0.0, %v298
    %300 = vmatmul.f32.gmra.mxu0 %v84
    %v301 = vpop.f32.mrf.mxu0
    %v302 = vadd.f32 0.0, %v301
    %303 = vmatmul.f32.gmra.mxu0 %v85
    %v304 = vpop.f32.mrf.mxu0
    %v305 = vadd.f32 0.0, %v304
    %306 = vmatmul.f32.gmra.mxu0 %v86
    %v307 = vpop.f32.mrf.mxu0
    %v308 = vadd.f32 0.0, %v307
    %309 = vmatmul.f32.gmra.mxu0 %v87
    %v310 = vpop.f32.mrf.mxu0
    %v311 = vadd.f32 0.0, %v310
    %312 = vdwg.mxu0
    %v313 = vmax.f32 %v122, 0.0
    %v314 = vmax.f32 %v125, 0.0
    %v315 = vmax.f32 %v128, 0.0
    %v316 = vmax.f32 %v131, 0.0
    %v317 = vmax.f32 %v134, 0.0
    %v318 = vmax.f32 %v137, 0.0
    %v319 = vmax.f32 %v140, 0.0
    %v320 = vmax.f32 %v143, 0.0
    %v321 = vmax.f32 %v146, 0.0
    %v322 = vmax.f32 %v149, 0.0
    %v323 = vmax.f32 %v152, 0.0
    %v324 = vmax.f32 %v155, 0.0
    %v325 = vmax.f32 %v158, 0.0
    %v326 = vmax.f32 %v161, 0.0
    %v327 = vmax.f32 %v164, 0.0
    %v328 = vmax.f32 %v167, 0.0
    %v329 = vmax.f32 %v170, 0.0
    %v330 = vmax.f32 %v173, 0.0
    %v331 = vmax.f32 %v176, 0.0
    %v332 = vmax.f32 %v179, 0.0
    %v333 = vmax.f32 %v182, 0.0
    %v334 = vmax.f32 %v185, 0.0
    %v335 = vmax.f32 %v188, 0.0
    %v336 = vmax.f32 %v191, 0.0
    %v337 = vmax.f32 %v194, 0.0
    %v338 = vmax.f32 %v197, 0.0
    %v339 = vmax.f32 %v200, 0.0
    %v340 = vmax.f32 %v203, 0.0
    %v341 = vmax.f32 %v206, 0.0
    %v342 = vmax.f32 %v209, 0.0
    %v343 = vmax.f32 %v212, 0.0
    %v344 = vmax.f32 %v215, 0.0
    %v345 = vmax.f32 %v218, 0.0
    %v346 = vmax.f32 %v221, 0.0
    %v347 = vmax.f32 %v224, 0.0
    %v348 = vmax.f32 %v227, 0.0
    %v349 = vmax.f32 %v230, 0.0
    %v350 = vmax.f32 %v233, 0.0
    %v351 = vmax.f32 %v236, 0.0
    %v352 = vmax.f32 %v239, 0.0
    %v353 = vmax.f32 %v242, 0.0
    %v354 = vmax.f32 %v245, 0.0
    %v355 = vmax.f32 %v248, 0.0
    %v356 = vmax.f32 %v251, 0.0
    %v357 = vmax.f32 %v254, 0.0
    %v358 = vmax.f32 %v257, 0.0
    %v359 = vmax.f32 %v260, 0.0
    %v360 = vmax.f32 %v263, 0.0
    %v361 = vmax.f32 %v266, 0.0
    %v362 = vmax.f32 %v269, 0.0
    %v363 = vmax.f32 %v272, 0.0
    %v364 = vmax.f32 %v275, 0.0
    %v365 = vmax.f32 %v278, 0.0
    %v366 = vmax.f32 %v281, 0.0
    %v367 = vmax.f32 %v284, 0.0
    %v368 = vmax.f32 %v287, 0.0
    %v369 = vmax.f32 %v290, 0.0
    %v370 = vmax.f32 %v293, 0.0
    %v371 = vmax.f32 %v296, 0.0
    %v372 = vmax.f32 %v299, 0.0
    %v373 = vmax.f32 %v302, 0.0
    %v374 = vmax.f32 %v305, 0.0
    %v375 = vmax.f32 %v308, 0.0
    %v376 = vmax.f32 %v311, 0.0
    %v377 = vld [vmem:[%s1] sm:$0xff]
    %379 = vst [vmem:[#allocation1] ss:$4 sm:$0xff] %v377
    %v380 = vld.sshfl [vmem:[#allocation1] sm:$0xff pattern:$0x73625140]
    %v381 = vld.sshfl [vmem:[#allocation1 + $0x8] sm:$0xff pattern:$0x73625140]
    %v382 = vld.sshfl [vmem:[#allocation1 + $0x10] sm:$0xff pattern:$0x73625140]
    %v383 = vld.sshfl [vmem:[#allocation1 + $0x18] sm:$0xff pattern:$0x73625140]
    %388 = vmatpush.msra.mxu0 %v328
    %389 = vmatpush.msra.mxu0 %v327
    %390 = vmatpush.msra.mxu0 %v326
    %391 = vmatpush.msra.mxu0 %v325
    %392 = vmatpush.msra.mxu0 %v324
    %393 = vmatpush.msra.mxu0 %v323
    %394 = vmatpush.msra.mxu0 %v322
    %395 = vmatpush.msra.mxu0 %v321
    %396 = vmatpush.msra.mxu0 %v320
    %397 = vmatpush.msra.mxu0 %v319
    %398 = vmatpush.msra.mxu0 %v318
    %399 = vmatpush.msra.mxu0 %v317
    %400 = vmatpush.msra.mxu0 %v316
    %401 = vmatpush.msra.mxu0 %v315
    %402 = vmatpush.msra.mxu0 %v314
    %403 = vmatpush.msra.mxu0 %v313
    %404 = vmatmul.f32.gmra.mxu0 %v380
    %v405 = vpop.f32.mrf.mxu0
    %v406 = vadd.f32 0.0, %v405
    %407 = vdwg.mxu0
    %408 = vmatpush.msra.mxu0 %v344
    %409 = vmatpush.msra.mxu0 %v343
    %410 = vmatpush.msra.mxu0 %v342
    %411 = vmatpush.msra.mxu0 %v341
    %412 = vmatpush.msra.mxu0 %v340
    %413 = vmatpush.msra.mxu0 %v339
    %414 = vmatpush.msra.mxu0 %v338
    %415 = vmatpush.msra.mxu0 %v337
    %416 = vmatpush.msra.mxu0 %v336
    %417 = vmatpush.msra.mxu0 %v335
    %418 = vmatpush.msra.mxu0 %v334
    %419 = vmatpush.msra.mxu0 %v333
    %420 = vmatpush.msra.mxu0 %v332
    %421 = vmatpush.msra.mxu0 %v331
    %422 = vmatpush.msra.mxu0 %v330
    %423 = vmatpush.msra.mxu0 %v329
    %424 = vmatmul.f32.gmra.mxu0 %v381
    %v425 = vpop.f32.mrf.mxu0
    %v426 = vadd.f32 %v406, %v425
    %427 = vdwg.mxu0
    %428 = vmatpush.msra.mxu0 %v360
    %429 = vmatpush.msra.mxu0 %v359
    %430 = vmatpush.msra.mxu0 %v358
    %431 = vmatpush.msra.mxu0 %v357
    %432 = vmatpush.msra.mxu0 %v356
    %433 = vmatpush.msra.mxu0 %v355
    %434 = vmatpush.msra.mxu0 %v354
    %435 = vmatpush.msra.mxu0 %v353
    %436 = vmatpush.msra.mxu0 %v352
    %437 = vmatpush.msra.mxu0 %v351
    %438 = vmatpush.msra.mxu0 %v350
    %439 = vmatpush.msra.mxu0 %v349
    %440 = vmatpush.msra.mxu0 %v348
    %441 = vmatpush.msra.mxu0 %v347
    %442 = vmatpush.msra.mxu0 %v346
    %443 = vmatpush.msra.mxu0 %v345
    %444 = vmatmul.f32.gmra.mxu0 %v382
    %v445 = vpop.f32.mrf.mxu0
    %v446 = vadd.f32 %v426, %v445
    %447 = vdwg.mxu0
    %448 = vmatpush.msra.mxu0 %v376
    %449 = vmatpush.msra.mxu0 %v375
    %450 = vmatpush.msra.mxu0 %v374
    %451 = vmatpush.msra.mxu0 %v373
    %452 = vmatpush.msra.mxu0 %v372
    %453 = vmatpush.msra.mxu0 %v371
    %454 = vmatpush.msra.mxu0 %v370
    %455 = vmatpush.msra.mxu0 %v369
    %456 = vmatpush.msra.mxu0 %v368
    %457 = vmatpush.msra.mxu0 %v367
    %458 = vmatpush.msra.mxu0 %v366
    %459 = vmatpush.msra.mxu0 %v365
    %460 = vmatpush.msra.mxu0 %v364
    %461 = vmatpush.msra.mxu0 %v363
    %462 = vmatpush.msra.mxu0 %v362
    %463 = vmatpush.msra.mxu0 %v361
    %464 = vmatmul.f32.gmra.mxu0 %v383
    %v465 = vpop.f32.mrf.mxu0
    %v466 = vadd.f32 %v446, %v465
    %467 = vdwg.mxu0
    %v468 = vld [vmem:[%s3] sm:$0xff]
    %v469 = vld [vmem:[%s3 + $0x8] sm:$0xff]
    %v470 = vld [vmem:[%s3 + $0x10] sm:$0xff]
    %v471 = vld [vmem:[%s3 + $0x18] sm:$0xff]
    %v472 = vld [vmem:[%s3 + $0x20] sm:$0xff]
    %v473 = vld [vmem:[%s3 + $0x28] sm:$0xff]
    %v474 = vld [vmem:[%s3 + $0x30] sm:$0xff]
    %v475 = vld [vmem:[%s3 + $0x38] sm:$0xff]
    %v476 = vld [vmem:[%s3 + $0x40] sm:$0xff]
    %v477 = vld [vmem:[%s3 + $0x48] sm:$0xff]
    %v478 = vld [vmem:[%s3 + $0x50] sm:$0xff]
    %v479 = vld [vmem:[%s3 + $0x58] sm:$0xff]
    %v480 = vld [vmem:[%s3 + $0x60] sm:$0xff]
    %v481 = vld [vmem:[%s3 + $0x68] sm:$0xff]
    %v482 = vld [vmem:[%s3 + $0x70] sm:$0xff]
    %v483 = vld [vmem:[%s3 + $0x78] sm:$0xff]
    %484 = vmatpush.msra.mxu0 %v483
    %485 = vmatpush.msra.mxu0 %v482
    %486 = vmatpush.msra.mxu0 %v481
    %487 = vmatpush.msra.mxu0 %v480
    %488 = vmatpush.msra.mxu0 %v479
    %489 = vmatpush.msra.mxu0 %v478
    %490 = vmatpush.msra.mxu0 %v477
    %491 = vmatpush.msra.mxu0 %v476
    %492 = vmatpush.msra.mxu0 %v475
    %493 = vmatpush.msra.mxu0 %v474
    %494 = vmatpush.msra.mxu0 %v473
    %495 = vmatpush.msra.mxu0 %v472
    %496 = vmatpush.msra.mxu0 %v471
    %497 = vmatpush.msra.mxu0 %v470
    %498 = vmatpush.msra.mxu0 %v469
    %499 = vmatpush.msra.mxu0 %v468
    %500 = vmatmul.f32.gmra.mxu0 %v466
    %v501 = vpop.f32.mrf.mxu0
    %v502 = vadd.f32 0.0, %v501
    %503 = vdwg.mxu0
    %v504 = vmax.f32 %v502, 0.0
    %v505 = vld [vmem:[%s4] sm:$0xff]
    %v506 = vld [vmem:[%s4 + $0x8] sm:$0xff]
    %v507 = vld [vmem:[%s4 + $0x10] sm:$0xff]
    %v508 = vld [vmem:[%s4 + $0x18] sm:$0xff]
    %v509 = vld [vmem:[%s4 + $0x20] sm:$0xff]
    %v510 = vld [vmem:[%s4 + $0x28] sm:$0xff]
    %v511 = vld [vmem:[%s4 + $0x30] sm:$0xff]
    %v512 = vld [vmem:[%s4 + $0x38] sm:$0xff]
    %v513 = vld [vmem:[%s4 + $0x40] sm:$0xff]
    %v514 = vld [vmem:[%s4 + $0x48] sm:$0xff]
    %v515 = vld [vmem:[%s4 + $0x50] sm:$0xff]
    %v516 = vld [vmem:[%s4 + $0x58] sm:$0xff]
    %v517 = vld [vmem:[%s4 + $0x60] sm:$0xff]
    %v518 = vld [vmem:[%s4 + $0x68] sm:$0xff]
    %v519 = vld [vmem:[%s4 + $0x70] sm:$0xff]
    %v520 = vld [vmem:[%s4 + $0x78] sm:$0xff]
    %521 = vmatpush.msra.mxu0 %v520
    %522 = vmatpush.msra.mxu0 %v519
    %523 = vmatpush.msra.mxu0 %v518
    %524 = vmatpush.msra.mxu0 %v517
    %525 = vmatpush.msra.mxu0 %v516
    %526 = vmatpush.msra.mxu0 %v515
    %527 = vmatpush.msra.mxu0 %v514
    %528 = vmatpush.msra.mxu0 %v513
    %529 = vmatpush.msra.mxu0 %v512
    %530 = vmatpush.msra.mxu0 %v511
    %531 = vmatpush.msra.mxu0 %v510
    %532 = vmatpush.msra.mxu0 %v509
    %533 = vmatpush.msra.mxu0 %v508
    %534 = vmatpush.msra.mxu0 %v507
    %535 = vmatpush.msra.mxu0 %v506
    %536 = vmatpush.msra.mxu0 %v505
    %537 = vmatmul.f32.gmra.mxu0 %v504
    %v538 = vpop.f32.mrf.mxu0
    %v539 = vadd.f32 0.0, %v538
    %540 = vdwg.mxu0
    %v541 = vmax.f32 %v539, 0.0
    %v542 = vld [vmem:[%s5] sm:$0xff]
    %v543 = vld [vmem:[%s5 + $0x8] sm:$0xff]
    %v544 = vld [vmem:[%s5 + $0x10] sm:$0xff]
    %v545 = vld [vmem:[%s5 + $0x18] sm:$0xff]
    %v546 = vld [vmem:[%s5 + $0x20] sm:$0xff]
    %v547 = vld [vmem:[%s5 + $0x28] sm:$0xff]
    %v548 = vld [vmem:[%s5 + $0x30] sm:$0xff]
    %v549 = vld [vmem:[%s5 + $0x38] sm:$0xff]
    %v550 = vld [vmem:[%s5 + $0x40] sm:$0xff]
    %v551 = vld [vmem:[%s5 + $0x48] sm:$0xff]
    %v552 = vld [vmem:[%s5 + $0x50] sm:$0xff]
    %v553 = vld [vmem:[%s5 + $0x58] sm:$0xff]
    %v554 = vld [vmem:[%s5 + $0x60] sm:$0xff]
    %v555 = vld [vmem:[%s5 + $0x68] sm:$0xff]
    %v556 = vld [vmem:[%s5 + $0x70] sm:$0xff]
    %v557 = vld [vmem:[%s5 + $0x78] sm:$0xff]
    %558 = vmatpush.msra.mxu0 %v557
    %559 = vmatpush.msra.mxu0 %v556
    %560 = vmatpush.msra.mxu0 %v555
    %561 = vmatpush.msra.mxu0 %v554
    %562 = vmatpush.msra.mxu0 %v553
    %563 = vmatpush.msra.mxu0 %v552
    %564 = vmatpush.msra.mxu0 %v551
    %565 = vmatpush.msra.mxu0 %v550
    %566 = vmatpush.msra.mxu0 %v549
    %567 = vmatpush.msra.mxu0 %v548
    %568 = vmatpush.msra.mxu0 %v547
    %569 = vmatpush.msra.mxu0 %v546
    %570 = vmatpush.msra.mxu0 %v545
    %571 = vmatpush.msra.mxu0 %v544
    %572 = vmatpush.msra.mxu0 %v543
    %573 = vmatpush.msra.mxu0 %v542
    %574 = vmatmul.f32.gmra.mxu0 %v541
    %v575 = vpop.f32.mrf.mxu0
    %v576 = vadd.f32 0.0, %v575
    %577 = vdwg.mxu0
    %578 = vst [vmem:[#allocation2] sm:$0x3] %v576
    // Predicated region
    $region26: #{my_model_forward.1} parent=1 // pred_check
      _
    $region27: #{my_model_forward.1} parent=1 // pred_check_branch
      %580 = sbr.rel (0) target = $region29
    $region28: #{my_model_forward.1} parent=1 // pred_region
      %582 = vsyncadd [#allocation3], 0
      %s584 = sshll.u32 [#allocation2], 4
      %s585 = int_to_ptr.vmem [resolvable:$true] %s584
      %s586 = sshll.u32 %s6, 4
      %s587 = int_to_ptr.hbm [resolvable:$true] %s586
      %589 = dma.vmem_to_hbm [thread:$0]  %s585, 32, %s587, [#allocation3]
    $region29: #{my_model_forward.1} parent=1 // pred_fallthru
      _
    // Predicated region
    $region30: #{my_model_forward.1} parent=1 // pred_check
      _
    $region31: #{my_model_forward.1} parent=1 // pred_check_branch
      %591 = sbr.rel (0) target = $region33
    $region32: #{my_model_forward.1} parent=1 // pred_region
      %593 = dma.done [#allocation3], 32
    $region33: #{my_model_forward.1} parent=1 // pred_fallthru
      _
    %594 = vsyncpa [#allocation3], 1

</llo_original>
